<compile_context>
chip_gen: v7x
topology: tpu7x:2x2x1
jax: 0.10.0
libtpu: 0.0.40
codegen_flags: <defaults>
</compile_context>

<pallas_src>
import functools

import numpy as np

import jax
import jax.numpy as jnp
from jax.experimental import pallas as pl
from jax.experimental.pallas import tpu as pltpu


# ----------------------------------------------------------------------------
# Host-side constant interpolation matrices (PyTorch semantics).
# ----------------------------------------------------------------------------
def _bilinear_matrix(in_size: int, out_size: int, scale) -> np.ndarray:
    """(out_size, in_size) f32 bilinear matrix, PyTorch align_corners=False with
    a user-provided scale_factor: src = (dst + 0.5) / scale - 0.5, clamped."""
    dst = np.arange(out_size, dtype=np.float64)
    src = np.clip((dst + 0.5) / float(scale) - 0.5, 0.0, None)
    i0 = np.clip(np.floor(src).astype(np.int64), 0, in_size - 1)
    i1 = np.minimum(i0 + 1, in_size - 1)
    frac = (src - i0).astype(np.float32)
    w = np.zeros((out_size, in_size), np.float32)
    rows = np.arange(out_size)
    w[rows, i0] += (1.0 - frac)
    w[rows, i1] += frac
    return w


def _nearest_matrix(in_size: int, out_size: int, scale) -> np.ndarray:
    """(out_size, in_size) f32 nearest-neighbor selection matrix (PyTorch
    'nearest': src = min(floor(dst / scale), in_size - 1))."""
    dst = np.arange(out_size, dtype=np.float64)
    idx = np.minimum(np.floor(dst / float(scale)).astype(np.int64), in_size - 1)
    w = np.zeros((out_size, in_size), np.float32)
    w[np.arange(out_size), idx] = 1.0
    return w


# ----------------------------------------------------------------------------
# Planner helpers.
# ----------------------------------------------------------------------------
def _round_up(x: int, m: int) -> int:
    return ((x + m - 1) // m) * m


def _sublane(itemsize: int) -> int:
    # Native sublane packing of the I/O dtype: 8 rows f32, 16 rows bf16, 32 int8.
    return {1: 32, 2: 16, 4: 8}.get(itemsize, 8)


def _vmem_budgets():
    """(per-step block budget, vmem_limit_bytes), generation aware."""
    kind = ""
    try:
        kind = jax.devices()[0].device_kind.lower()
    except Exception:
        pass
    if "v7" in kind or "7x" in kind:
        return 10 << 20, 48 << 20     # 64 MiB physical VMEM, 2 TensorCores
    if "v5" in kind or "v6" in kind:
        return 28 << 20, 96 << 20     # 128 MiB physical VMEM, 1 TensorCore
    return 12 << 20, 48 << 20         # unknown: conservative everywhere


def _choose_b(nc: int, est_fn, budget: int, sub_io: int) -> int:
    """Planes per grid step.  Must divide nc and satisfy the (8,128) sublane
    rule on the flattened output block (multiple of 8 or the full extent)."""
    cands = [d for d in range(1, nc + 1)
             if nc % d == 0 and (d == nc or d % 8 == 0)]
    fitting = [d for d in cands if est_fn(d) <= budget]
    if not fitting:
        fitting = [min(cands)]

    def score(d):
        grid = nc // d
        return (grid >= 2,                      # >=2 steps: feed v7x's 2nd TC, enable pipelining
                (d % sub_io == 0) or d == nc,   # packed-sublane-dense bf16 stores (16-row blocks)
                d)                              # then biggest block (HBM roofline)
    return max(fitting, key=score)


def _fused_vmem(b, K, M, itemsize, sub_io):
    io = 2 * _round_up(b, sub_io) * _round_up(K, 128) * itemsize         # input, double-buffered
    io += 2 * _round_up(b, sub_io) * _round_up(M, 128) * itemsize        # output, double-buffered
    f32 = _round_up(b, 8) * (_round_up(K, 128) + _round_up(M, 128)) * 4  # in-kernel f32 values
    w = 2 * _round_up(K, 8) * _round_up(M, 128) * 4                      # resident weight (x2 buffering)
    return io + f32 + w


def _separable_vmem(b, h_in, w_in, h_out, w_out, itemsize, sub_io):
    hi, wi = _round_up(h_in, 8), _round_up(w_in, 128)
    ho, wo = _round_up(h_out, 8), _round_up(w_out, 128)
    io = 2 * b * _round_up(h_in, sub_io) * _round_up(w_in, 128) * itemsize
    io += 2 * _round_up(b, sub_io) * _round_up(h_out * w_out, 128) * itemsize
    f32 = b * (hi * wi + 2 * hi * wo + 2 * ho * wo) * 4                  # f32 input + intermediates
    w = 2 * (hi * _round_up(h_out, 128) + _round_up(w_in, 8) * wo) * 4   # resident weights (x2)
    return io + f32 + w


# ----------------------------------------------------------------------------
# Kernels.
# ----------------------------------------------------------------------------
def _fused_kernel(x_ref, w_ref, o_ref):
    # x_ref: (B, H_in*W_in) io dtype; w_ref: (K, M) f32 resident Kronecker weight;
    # o_ref: (B, H_out*W_out) io dtype.  One flat MXU matmul, f32 accumulation.
    x = x_ref[...].astype(jnp.float32)
    o_ref[...] = jnp.dot(x, w_ref[...],
                         preferred_element_type=jnp.float32).astype(o_ref.dtype)


def _separable_kernel(x_ref, wht_ref, wwt_ref, o_ref, *, h_out, w_out, w_pass_first):
    # x_ref: (B, H_in, W_in); wht_ref: (H_in, H_out) f32; wwt_ref: (W_in, W_out) f32;
    # o_ref: (B, H_out*W_out).  Two flat MXU matmuls with minor-dim transposes
    # between the passes; no broadcast_to / per-plane batched dots.
    b, h_in, w_in = x_ref.shape
    x = x_ref[...].astype(jnp.float32)
    if w_pass_first:
        t = jnp.dot(x.reshape(b * h_in, w_in), wwt_ref[...],
                    preferred_element_type=jnp.float32)                 # (b*H_in, W_out)
        t = jnp.swapaxes(t.reshape(b, h_in, w_out), 1, 2)               # (b, W_out, H_in)
        out = jnp.dot(t.reshape(b * w_out, h_in), wht_ref[...],
                      preferred_element_type=jnp.float32)               # (b*W_out, H_out)
        out = jnp.swapaxes(out.reshape(b, w_out, h_out), 1, 2)          # (b, H_out, W_out)
    else:
        t = jnp.dot(jnp.swapaxes(x, 1, 2).reshape(b * w_in, h_in), wht_ref[...],
                    preferred_element_type=jnp.float32)                 # (b*W_in, H_out)
        t = jnp.swapaxes(t.reshape(b, w_in, h_out), 1, 2)               # (b, H_out, W_in)
        out = jnp.dot(t.reshape(b * h_out, w_in), wwt_ref[...],
                      preferred_element_type=jnp.float32)               # (b*H_out, W_out)
        out = out.reshape(b, h_out, w_out)
    o_ref[...] = out.reshape(b, h_out * w_out).astype(o_ref.dtype)


# ----------------------------------------------------------------------------
# Wrapper.
# ----------------------------------------------------------------------------
@functools.partial(jax.jit, static_argnames=("scale_factor", "mode"))
def bfloat16_upsample_2d(x, *, scale_factor, mode="bilinear"):
    assert mode in ("bilinear", "nearest"), "unsupported mode"
    if isinstance(scale_factor, tuple):
        sh, sw = scale_factor
    else:
        sh = sw = scale_factor

    n, c, h_in, w_in = x.shape
    h_out, w_out = int(h_in * sh), int(w_in * sw)
    nc, K, M = n * c, h_in * w_in, h_out * w_out
    itemsize = jnp.dtype(x.dtype).itemsize
    sub_io = _sublane(itemsize)
    block_budget, vmem_limit = _vmem_budgets()

    mk = _bilinear_matrix if mode == "bilinear" else _nearest_matrix
    wh = mk(h_in, h_out, sh)        # (H_out, H_in) f32, host constant
    ww = mk(w_in, w_out, sw)        # (W_out, W_in) f32, host constant

    cparams = pltpu.CompilerParams(
        dimension_semantics=("parallel",),
        vmem_limit_bytes=vmem_limit,
    )

    # Fused single-matmul path when the Kronecker weight fits comfortably.
    w_kron_bytes = 2 * _round_up(K, 8) * _round_up(M, 128) * 4
    use_fused = w_kron_bytes <= min(block_budget, 16 << 20)

    if use_fused:
        # W[h*W_in + w, oh*W_out + ow] = Wh[oh, h] * Ww[ow, w]
        w_kron = jnp.asarray(np.kron(wh.T, ww.T))                       # (K, M) f32
        b = _choose_b(nc, lambda d: _fused_vmem(d, K, M, itemsize, sub_io),
                      block_budget, sub_io)
        out = pl.pallas_call(
            _fused_kernel,
            out_shape=jax.ShapeDtypeStruct((nc, M), x.dtype),
            grid_spec=pltpu.PrefetchScalarGridSpec(
                num_scalar_prefetch=0,
                grid=(nc // b,),
                in_specs=[
                    pl.BlockSpec((b, K), lambda i: (i, 0)),
                    pl.BlockSpec((K, M), lambda i: (0, 0)),    # resident weight
                ],
                out_specs=pl.BlockSpec((b, M), lambda i: (i, 0)),
            ),
            compiler_params=cparams,
        )(x.reshape(nc, K), w_kron)
    else:
        wht = jnp.asarray(wh.T)     # (H_in, H_out) f32
        wwt = jnp.asarray(ww.T)     # (W_in, W_out) f32
        # Pick the contraction order with fewer MACs.
        w_pass_first = h_in * w_out * (w_in + h_out) <= h_out * w_in * (h_in + w_out)
        b = _choose_b(nc,
                      lambda d: _separable_vmem(d, h_in, w_in, h_out, w_out,
                                                itemsize, sub_io),
                      block_budget, sub_io)
        kernel = functools.partial(_separable_kernel, h_out=h_out, w_out=w_out,
                                   w_pass_first=w_pass_first)
        out = pl.pallas_call(
            kernel,
            out_shape=jax.ShapeDtypeStruct((nc, M), x.dtype),
            grid_spec=pltpu.PrefetchScalarGridSpec(
                num_scalar_prefetch=0,
                grid=(nc // b,),
                in_specs=[
                    pl.BlockSpec((b, h_in, w_in), lambda i: (i, 0, 0)),
                    pl.BlockSpec((h_in, h_out), lambda i: (0, 0)),   # resident weight
                    pl.BlockSpec((w_in, w_out), lambda i: (0, 0)),   # resident weight
                ],
                out_specs=pl.BlockSpec((b, M), lambda i: (i, 0)),
            ),
            compiler_params=cparams,
        )(x.reshape(nc, h_in, w_in), wht, wwt)

    return out.reshape(n, c, h_out, w_out)


# ----------------------------------------------------------------------------
# Pure-JAX reference (f32 compute, cast back), mirrors the PyTorch module.
# ----------------------------------------------------------------------------
def _reference(x, scale_factor, mode="bilinear"):
    if isinstance(scale_factor, tuple):
        sh, sw = scale_factor
    else:
        sh = sw = scale_factor
    n, c, h_in, w_in = x.shape
    mk = _bilinear_matrix if mode == "bilinear" else _nearest_matrix
    wh = jnp.asarray(mk(h_in, int(h_in * sh), sh))
    ww = jnp.asarray(mk(w_in, int(w_in * sw), sw))
    out = jnp.einsum("oh,nchw,pw->ncop", wh, x.astype(jnp.float32), ww)
    return out.astype(x.dtype)


if __name__ == "__main__":
    key = jax.random.PRNGKey(0)
    n, c, h, w = 2, 4, 16, 16
    x = jax.random.normal(key, (n, c, h, w), dtype=jnp.float32).astype(jnp.bfloat16)

    # Isotropic 2x upsample (the common config for this neck).
    out = jax.block_until_ready(
        bfloat16_upsample_2d(x, scale_factor=2, mode="bilinear"))
    ref = _reference(x, 2)
    assert out.shape == (n, c, 2 * h, 2 * w), out.shape
    assert out.dtype == x.dtype, out.dtype
    err = jnp.max(jnp.abs(out.astype(jnp.float32) - ref.astype(jnp.float32)))
    # f32 weights + f32 accumulation: differences vs the reference are only
    # accumulation order plus at most one bf16 ulp from the final cast.
    assert float(err) <= 6e-2, f"max abs err {float(err)}"

    # Anisotropic scale exercises the non-square weight construction.
    out2 = jax.block_until_ready(
        bfloat16_upsample_2d(x, scale_factor=(2, 3), mode="bilinear"))
    ref2 = _reference(x, (2, 3))
    assert out2.shape == (n, c, 2 * h, 3 * w), out2.shape
    assert out2.dtype == x.dtype, out2.dtype
    err2 = jnp.max(jnp.abs(out2.astype(jnp.float32) - ref2.astype(jnp.float32)))
    assert float(err2) <= 6e-2, f"max abs err {float(err2)}"

    print("KERNEL_OK")
</pallas_src>

<mosaic_0001>
module attributes {stable_mosaic.version = 11 : i64} {
  func.func @_fused_kernel(%arg0: i32, %arg1: memref<8x256xbf16, #tpu.memory_space<vmem>>, %arg2: memref<256x1024xf32, #tpu.memory_space<vmem>>, %arg3: memref<8x1024xbf16, #tpu.memory_space<vmem>>) attributes {dimension_semantics = [#tpu.dimension_semantics<parallel>], iteration_bounds = array<i64: 1>, scalar_prefetch = 0 : i64, scratch_operands = 0 : i64, tpu.core_type = #tpu.core_type<tc>, window_params = [{transform_indices = @transform_0, window_bounds = array<i64: 8, 256>}, {pipeline_mode = #tpu.pipeline_mode<synchronous>, transform_indices = @transform_1, window_bounds = array<i64: 256, 1024>}, {transform_indices = @transform_2, window_bounds = array<i64: 8, 1024>}]} {
    %c0 = arith.constant 0 : index
    %c0_0 = arith.constant 0 : index
    %0 = vector.load %arg1[%c0, %c0_0] : memref<8x256xbf16, #tpu.memory_space<vmem>>, vector<8x256xbf16>
    %1 = arith.extf %0 : vector<8x256xbf16> to vector<8x256xf32>
    %c0_1 = arith.constant 0 : index
    %c0_2 = arith.constant 0 : index
    %2 = vector.load %arg2[%c0_1, %c0_2] : memref<256x1024xf32, #tpu.memory_space<vmem>>, vector<256x1024xf32>
    %cst = arith.constant dense<0.000000e+00> : vector<8x1024xf32>
    %3 = tpu.matmul %1, %2, %cst {dimension_numbers = #tpu.dot_dimension_numbers<[1], [0], [0], [1], [0, 0, 1, 1], [], []>} : vector<8x256xf32>, vector<256x1024xf32>, vector<8x1024xf32> -> vector<8x1024xf32>
    %4 = arith.truncf %3 : vector<8x1024xf32> to vector<8x1024xbf16>
    %c0_3 = arith.constant 0 : index
    %c0_4 = arith.constant 0 : index
    %5 = vector.load %arg3[%c0_3, %c0_4] : memref<8x1024xbf16, #tpu.memory_space<vmem>>, vector<8x1024xbf16>
    tpu.vector_store %arg3[%c0_3, %c0_4], %4 {strides = array<i32>} : memref<8x1024xbf16, #tpu.memory_space<vmem>>, vector<8x1024xbf16>,
    return
  }
  func.func @transform_0(%arg0: i32) -> (i32, i32) {
    %c0_i32 = arith.constant 0 : i32
    %c0_i32_0 = arith.constant 0 : i32
    return %arg0, %c0_i32 : i32, i32
  }
  func.func @transform_1(%arg0: i32) -> (i32, i32) {
    %c0_i32 = arith.constant 0 : i32
    %c0_i32_0 = arith.constant 0 : i32
    %c0_i32_1 = arith.constant 0 : i32
    return %c0_i32, %c0_i32_0 : i32, i32
  }
  func.func @transform_2(%arg0: i32) -> (i32, i32) {
    %c0_i32 = arith.constant 0 : i32
    %c0_i32_0 = arith.constant 0 : i32
    return %arg0, %c0_i32 : i32, i32
  }
}

</mosaic_0001>

<llo_original>
// kernel: bfloat16_upsample_2d.1
$region0: #{bfloat16_upsample_2d.1}
  #allocation0 [shape = 'u32[]', space=smem, size = 0x4, offset = 0x4, fixed_abs, tag = 'smem constant byte address 0x4 - core index']
  #allocation1 [shape = 'u32[144,128]{1,0:T(1,128)}', space=vmem, size = 0x12000, scoped, tag = 'internal scratch']
  %s0 = inlined_call_operand.vmem [shape: bf16[8,256], index: 0, kind: input, shape index: {}]
  %s1 = inlined_call_operand.hbm [shape: f32[256,1024], index: 1, kind: input, shape index: {}]
  %s2 = inlined_call_operand.vmem [shape: bf16[8,1024], index: 2, kind: output, shape index: {}]
  %s3 = sld [smem:[#allocation0]]
  $region22: #{bfloat16_upsample_2d.1} parent=0
    _
  %s5 = ssub.s32 1, %s3
  %s6 = scalar_select 0, %s5, %s3
  $region1: #{bfloat16_upsample_2d.1} parent=0
    #allocation2 [shape = 'u8[1048576]{0}', space=vmem, size = 0x100000, scoped, tag = 'input window, operand 1, single buffered']
    #allocation3 [shape = 's32[1]{0}', space=sflag, size = 0x4, scoped, tag = 'scoped memory for bfloat16_upsample_2d.1']
    %7 = vsyncpa [#allocation3], 0
    // Predicated region
    $region2: #{bfloat16_upsample_2d.1} parent=1 // pred_check
      _
    $region3: #{bfloat16_upsample_2d.1} parent=1 // pred_check_branch
      %9 = sbr.rel (0) target = $region5
    $region4: #{bfloat16_upsample_2d.1} parent=1 // pred_region
      _
    $region5: #{bfloat16_upsample_2d.1} parent=1 // pred_fallthru
      _
    // Predicated region
    $region6: #{bfloat16_upsample_2d.1} parent=1 // pred_check
      _
    $region7: #{bfloat16_upsample_2d.1} parent=1 // pred_check_branch
      %11 = sbr.rel (0) target = $region9
    $region8: #{bfloat16_upsample_2d.1} parent=1 // pred_region
      %s13 = ssub.s32 32768, 32768
      %14 = vsyncadd [#allocation3], %s13
      %s15 = sshll.u32 [#allocation2], 4
      %s16 = int_to_ptr.vmem [resolvable:$true] %s15
      %21 = dma.hbm_to_vmem [thread:$0]  %s1, 32768, %s16, [#allocation3], 1024, 1024, 64
    $region9: #{bfloat16_upsample_2d.1} parent=1 // pred_fallthru
      _
    // Predicated region
    $region10: #{bfloat16_upsample_2d.1} parent=1 // pred_check
      _
    $region11: #{bfloat16_upsample_2d.1} parent=1 // pred_check_branch
      %23 = sbr.rel (0) target = $region13
    $region12: #{bfloat16_upsample_2d.1} parent=1 // pred_region
      %24 = dma.done [#allocation3], 32768
    $region13: #{bfloat16_upsample_2d.1} parent=1 // pred_fallthru
      _
    %v25 = vld [vmem:[%s0] sm:$0xff]
    %v26 = vunpack.c.l.bf16 %v25
    %v27 = vunpack.c.h.bf16 %v25
    %v28 = vld [vmem:[#allocation2] sm:$0xff]
    %v29 = vld [vmem:[#allocation2 + $0x8] sm:$0xff]
    %v30 = vld [vmem:[#allocation2 + $0x10] sm:$0xff]
    %v31 = vld [vmem:[#allocation2 + $0x18] sm:$0xff]
    %v32 = vld [vmem:[#allocation2 + $0x20] sm:$0xff]
    %v33 = vld [vmem:[#allocation2 + $0x28] sm:$0xff]
    %v34 = vld [vmem:[#allocation2 + $0x30] sm:$0xff]
    %v35 = vld [vmem:[#allocation2 + $0x38] sm:$0xff]
    %v36 = vld [vmem:[#allocation2 + $0x40] sm:$0xff]
    %v37 = vld [vmem:[#allocation2 + $0x48] sm:$0xff]
    %v38 = vld [vmem:[#allocation2 + $0x50] sm:$0xff]
    %v39 = vld [vmem:[#allocation2 + $0x58] sm:$0xff]
    %v40 = vld [vmem:[#allocation2 + $0x60] sm:$0xff]
    %v41 = vld [vmem:[#allocation2 + $0x68] sm:$0xff]
    %v42 = vld [vmem:[#allocation2 + $0x70] sm:$0xff]
    %v43 = vld [vmem:[#allocation2 + $0x78] sm:$0xff]
    %v44 = vld [vmem:[#allocation2 + $0x80] sm:$0xff]
    %v45 = vld [vmem:[#allocation2 + $0x88] sm:$0xff]
    %v46 = vld [vmem:[#allocation2 + $0x90] sm:$0xff]
    %v47 = vld [vmem:[#allocation2 + $0x98] sm:$0xff]
    %v48 = vld [vmem:[#allocation2 + $0xa0] sm:$0xff]
    %v49 = vld [vmem:[#allocation2 + $0xa8] sm:$0xff]
    %v50 = vld [vmem:[#allocation2 + $0xb0] sm:$0xff]
    %v51 = vld [vmem:[#allocation2 + $0xb8] sm:$0xff]
    %v52 = vld [vmem:[#allocation2 + $0xc0] sm:$0xff]
    %v53 = vld [vmem:[#allocation2 + $0xc8] sm:$0xff]
    %v54 = vld [vmem:[#allocation2 + $0xd0] sm:$0xff]
    %v55 = vld [vmem:[#allocation2 + $0xd8] sm:$0xff]
    %v56 = vld [vmem:[#allocation2 + $0xe0] sm:$0xff]
    %v57 = vld [vmem:[#allocation2 + $0xe8] sm:$0xff]
    %v58 = vld [vmem:[#allocation2 + $0xf0] sm:$0xff]
    %v59 = vld [vmem:[#allocation2 + $0xf8] sm:$0xff]
    %v60 = vld [vmem:[#allocation2 + $0x100] sm:$0xff]
    %v61 = vld [vmem:[#allocation2 + $0x108] sm:$0xff]
    %v62 = vld [vmem:[#allocation2 + $0x110] sm:$0xff]
    %v63 = vld [vmem:[#allocation2 + $0x118] sm:$0xff]
    %v64 = vld [vmem:[#allocation2 + $0x120] sm:$0xff]
    %v65 = vld [vmem:[#allocation2 + $0x128] sm:$0xff]
    %v66 = vld [vmem:[#allocation2 + $0x130] sm:$0xff]
    %v67 = vld [vmem:[#allocation2 + $0x138] sm:$0xff]
    %v68 = vld [vmem:[#allocation2 + $0x140] sm:$0xff]
    %v69 = vld [vmem:[#allocation2 + $0x148] sm:$0xff]
    %v70 = vld [vmem:[#allocation2 + $0x150] sm:$0xff]
    %v71 = vld [vmem:[#allocation2 + $0x158] sm:$0xff]
    %v72 = vld [vmem:[#allocation2 + $0x160] sm:$0xff]
    %v73 = vld [vmem:[#allocation2 + $0x168] sm:$0xff]
    %v74 = vld [vmem:[#allocation2 + $0x170] sm:$0xff]
    %v75 = vld [vmem:[#allocation2 + $0x178] sm:$0xff]
    %v76 = vld [vmem:[#allocation2 + $0x180] sm:$0xff]
    %v77 = vld [vmem:[#allocation2 + $0x188] sm:$0xff]
    %v78 = vld [vmem:[#allocation2 + $0x190] sm:$0xff]
    %v79 = vld [vmem:[#allocation2 + $0x198] sm:$0xff]
    %v80 = vld [vmem:[#allocation2 + $0x1a0] sm:$0xff]
    %v81 = vld [vmem:[#allocation2 + $0x1a8] sm:$0xff]
    %v82 = vld [vmem:[#allocation2 + $0x1b0] sm:$0xff]
    %v83 = vld [vmem:[#allocation2 + $0x1b8] sm:$0xff]
    %v84 = vld [vmem:[#allocation2 + $0x1c0] sm:$0xff]
    %v85 = vld [vmem:[#allocation2 + $0x1c8] sm:$0xff]
    %v86 = vld [vmem:[#allocation2 + $0x1d0] sm:$0xff]
    %v87 = vld [vmem:[#allocation2 + $0x1d8] sm:$0xff]
    %v88 = vld [vmem:[#allocation2 + $0x1e0] sm:$0xff]
    %v89 = vld [vmem:[#allocation2 + $0x1e8] sm:$0xff]
    %v90 = vld [vmem:[#allocation2 + $0x1f0] sm:$0xff]
    %v91 = vld [vmem:[#allocation2 + $0x1f8] sm:$0xff]
    %v92 = vld [vmem:[#allocation2 + $0x200] sm:$0xff]
    %v93 = vld [vmem:[#allocation2 + $0x208] sm:$0xff]
    %v94 = vld [vmem:[#allocation2 + $0x210] sm:$0xff]
    %v95 = vld [vmem:[#allocation2 + $0x218] sm:$0xff]
    %v96 = vld [vmem:[#allocation2 + $0x220] sm:$0xff]
    %v97 = vld [vmem:[#allocation2 + $0x228] sm:$0xff]
    %v98 = vld [vmem:[#allocation2 + $0x230] sm:$0xff]
    %v99 = vld [vmem:[#allocation2 + $0x238] sm:$0xff]
    %v100 = vld [vmem:[#allocation2 + $0x240] sm:$0xff]
    %v101 = vld [vmem:[#allocation2 + $0x248] sm:$0xff]
    %v102 = vld [vmem:[#allocation2 + $0x250] sm:$0xff]
    %v103 = vld [vmem:[#allocation2 + $0x258] sm:$0xff]
    %v104 = vld [vmem:[#allocation2 + $0x260] sm:$0xff]
    %v105 = vld [vmem:[#allocation2 + $0x268] sm:$0xff]
    %v106 = vld [vmem:[#allocation2 + $0x270] sm:$0xff]
    %v107 = vld [vmem:[#allocation2 + $0x278] sm:$0xff]
    %v108 = vld [vmem:[#allocation2 + $0x280] sm:$0xff]
    %v109 = vld [vmem:[#allocation2 + $0x288] sm:$0xff]
    %v110 = vld [vmem:[#allocation2 + $0x290] sm:$0xff]
    %v111 = vld [vmem:[#allocation2 + $0x298] sm:$0xff]
    %v112 = vld [vmem:[#allocation2 + $0x2a0] sm:$0xff]
    %v113 = vld [vmem:[#allocation2 + $0x2a8] sm:$0xff]
    %v114 = vld [vmem:[#allocation2 + $0x2b0] sm:$0xff]
    %v115 = vld [vmem:[#allocation2 + $0x2b8] sm:$0xff]
    %v116 = vld [vmem:[#allocation2 + $0x2c0] sm:$0xff]
    %v117 = vld [vmem:[#allocation2 + $0x2c8] sm:$0xff]
    %v118 = vld [vmem:[#allocation2 + $0x2d0] sm:$0xff]
    %v119 = vld [vmem:[#allocation2 + $0x2d8] sm:$0xff]
    %v120 = vld [vmem:[#allocation2 + $0x2e0] sm:$0xff]
    %v121 = vld [vmem:[#allocation2 + $0x2e8] sm:$0xff]
    %v122 = vld [vmem:[#allocation2 + $0x2f0] sm:$0xff]
    %v123 = vld [vmem:[#allocation2 + $0x2f8] sm:$0xff]
    %v124 = vld [vmem:[#allocation2 + $0x300] sm:$0xff]
    %v125 = vld [vmem:[#allocation2 + $0x308] sm:$0xff]
    %v126 = vld [vmem:[#allocation2 + $0x310] sm:$0xff]
    %v127 = vld [vmem:[#allocation2 + $0x318] sm:$0xff]
    %v128 = vld [vmem:[#allocation2 + $0x320] sm:$0xff]
    %v129 = vld [vmem:[#allocation2 + $0x328] sm:$0xff]
    %v130 = vld [vmem:[#allocation2 + $0x330] sm:$0xff]
    %v131 = vld [vmem:[#allocation2 + $0x338] sm:$0xff]
    %v132 = vld [vmem:[#allocation2 + $0x340] sm:$0xff]
    %v133 = vld [vmem:[#allocation2 + $0x348] sm:$0xff]
    %v134 = vld [vmem:[#allocation2 + $0x350] sm:$0xff]
    %v135 = vld [vmem:[#allocation2 + $0x358] sm:$0xff]
    %v136 = vld [vmem:[#allocation2 + $0x360] sm:$0xff]
    %v137 = vld [vmem:[#allocation2 + $0x368] sm:$0xff]
    %v138 = vld [vmem:[#allocation2 + $0x370] sm:$0xff]
    %v139 = vld [vmem:[#allocation2 + $0x378] sm:$0xff]
    %v140 = vld [vmem:[#allocation2 + $0x380] sm:$0xff]
    %v141 = vld [vmem:[#allocation2 + $0x388] sm:$0xff]
    %v142 = vld [vmem:[#allocation2 + $0x390] sm:$0xff]
    %v143 = vld [vmem:[#allocation2 + $0x398] sm:$0xff]
    %v144 = vld [vmem:[#allocation2 + $0x3a0] sm:$0xff]
    %v145 = vld [vmem:[#allocation2 + $0x3a8] sm:$0xff]
    %v146 = vld [vmem:[#allocation2 + $0x3b0] sm:$0xff]
    %v147 = vld [vmem:[#allocation2 + $0x3b8] sm:$0xff]
    %v148 = vld [vmem:[#allocation2 + $0x3c0] sm:$0xff]
    %v149 = vld [vmem:[#allocation2 + $0x3c8] sm:$0xff]
    %v150 = vld [vmem:[#allocation2 + $0x3d0] sm:$0xff]
    %v151 = vld [vmem:[#allocation2 + $0x3d8] sm:$0xff]
    %v152 = vld [vmem:[#allocation2 + $0x3e0] sm:$0xff]
    %v153 = vld [vmem:[#allocation2 + $0x3e8] sm:$0xff]
    %v154 = vld [vmem:[#allocation2 + $0x3f0] sm:$0xff]
    %v155 = vld [vmem:[#allocation2 + $0x3f8] sm:$0xff]
    %v156 = vld [vmem:[#allocation2 + $0x400] sm:$0xff]
    %v157 = vld [vmem:[#allocation2 + $0x408] sm:$0xff]
    %v158 = vld [vmem:[#allocation2 + $0x410] sm:$0xff]
    %v159 = vld [vmem:[#allocation2 + $0x418] sm:$0xff]
    %v160 = vld [vmem:[#allocation2 + $0x420] sm:$0xff]
    %v161 = vld [vmem:[#allocation2 + $0x428] sm:$0xff]
    %v162 = vld [vmem:[#allocation2 + $0x430] sm:$0xff]
    %v163 = vld [vmem:[#allocation2 + $0x438] sm:$0xff]
    %v164 = vld [vmem:[#allocation2 + $0x440] sm:$0xff]
    %v165 = vld [vmem:[#allocation2 + $0x448] sm:$0xff]
    %v166 = vld [vmem:[#allocation2 + $0x450] sm:$0xff]
    %v167 = vld [vmem:[#allocation2 + $0x458] sm:$0xff]
    %v168 = vld [vmem:[#allocation2 + $0x460] sm:$0xff]
    %v169 = vld [vmem:[#allocation2 + $0x468] sm:$0xff]
    %v170 = vld [vmem:[#allocation2 + $0x470] sm:$0xff]
    %v171 = vld [vmem:[#allocation2 + $0x478] sm:$0xff]
    %v172 = vld [vmem:[#allocation2 + $0x480] sm:$0xff]
    %v173 = vld [vmem:[#allocation2 + $0x488] sm:$0xff]
    %v174 = vld [vmem:[#allocation2 + $0x490] sm:$0xff]
    %v175 = vld [vmem:[#allocation2 + $0x498] sm:$0xff]
    %v176 = vld [vmem:[#allocation2 + $0x4a0] sm:$0xff]
    %v177 = vld [vmem:[#allocation2 + $0x4a8] sm:$0xff]
    %v178 = vld [vmem:[#allocation2 + $0x4b0] sm:$0xff]
    %v179 = vld [vmem:[#allocation2 + $0x4b8] sm:$0xff]
    %v180 = vld [vmem:[#allocation2 + $0x4c0] sm:$0xff]
    %v181 = vld [vmem:[#allocation2 + $0x4c8] sm:$0xff]
    %v182 = vld [vmem:[#allocation2 + $0x4d0] sm:$0xff]
    %v183 = vld [vmem:[#allocation2 + $0x4d8] sm:$0xff]
    %v184 = vld [vmem:[#allocation2 + $0x4e0] sm:$0xff]
    %v185 = vld [vmem:[#allocation2 + $0x4e8] sm:$0xff]
    %v186 = vld [vmem:[#allocation2 + $0x4f0] sm:$0xff]
    %v187 = vld [vmem:[#allocation2 + $0x4f8] sm:$0xff]
    %v188 = vld [vmem:[#allocation2 + $0x500] sm:$0xff]
    %v189 = vld [vmem:[#allocation2 + $0x508] sm:$0xff]
    %v190 = vld [vmem:[#allocation2 + $0x510] sm:$0xff]
    %v191 = vld [vmem:[#allocation2 + $0x518] sm:$0xff]
    %v192 = vld [vmem:[#allocation2 + $0x520] sm:$0xff]
    %v193 = vld [vmem:[#allocation2 + $0x528] sm:$0xff]
    %v194 = vld [vmem:[#allocation2 + $0x530] sm:$0xff]
    %v195 = vld [vmem:[#allocation2 + $0x538] sm:$0xff]
    %v196 = vld [vmem:[#allocation2 + $0x540] sm:$0xff]
    %v197 = vld [vmem:[#allocation2 + $0x548] sm:$0xff]
    %v198 = vld [vmem:[#allocation2 + $0x550] sm:$0xff]
    %v199 = vld [vmem:[#allocation2 + $0x558] sm:$0xff]
    %v200 = vld [vmem:[#allocation2 + $0x560] sm:$0xff]
    %v201 = vld [vmem:[#allocation2 + $0x568] sm:$0xff]
    %v202 = vld [vmem:[#allocation2 + $0x570] sm:$0xff]
    %v203 = vld [vmem:[#allocation2 + $0x578] sm:$0xff]
    %v204 = vld [vmem:[#allocation2 + $0x580] sm:$0xff]
    %v205 = vld [vmem:[#allocation2 + $0x588] sm:$0xff]
    %v206 = vld [vmem:[#allocation2 + $0x590] sm:$0xff]
    %v207 = vld [vmem:[#allocation2 + $0x598] sm:$0xff]
    %v208 = vld [vmem:[#allocation2 + $0x5a0] sm:$0xff]
    %v209 = vld [vmem:[#allocation2 + $0x5a8] sm:$0xff]
    %v210 = vld [vmem:[#allocation2 + $0x5b0] sm:$0xff]
    %v211 = vld [vmem:[#allocation2 + $0x5b8] sm:$0xff]
    %v212 = vld [vmem:[#allocation2 + $0x5c0] sm:$0xff]
    %v213 = vld [vmem:[#allocation2 + $0x5c8] sm:$0xff]
    %v214 = vld [vmem:[#allocation2 + $0x5d0] sm:$0xff]
    %v215 = vld [vmem:[#allocation2 + $0x5d8] sm:$0xff]
    %v216 = vld [vmem:[#allocation2 + $0x5e0] sm:$0xff]
    %v217 = vld [vmem:[#allocation2 + $0x5e8] sm:$0xff]
    %v218 = vld [vmem:[#allocation2 + $0x5f0] sm:$0xff]
    %v219 = vld [vmem:[#allocation2 + $0x5f8] sm:$0xff]
    %v220 = vld [vmem:[#allocation2 + $0x600] sm:$0xff]
    %v221 = vld [vmem:[#allocation2 + $0x608] sm:$0xff]
    %v222 = vld [vmem:[#allocation2 + $0x610] sm:$0xff]
    %v223 = vld [vmem:[#allocation2 + $0x618] sm:$0xff]
    %v224 = vld [vmem:[#allocation2 + $0x620] sm:$0xff]
    %v225 = vld [vmem:[#allocation2 + $0x628] sm:$0xff]
    %v226 = vld [vmem:[#allocation2 + $0x630] sm:$0xff]
    %v227 = vld [vmem:[#allocation2 + $0x638] sm:$0xff]
    %v228 = vld [vmem:[#allocation2 + $0x640] sm:$0xff]
    %v229 = vld [vmem:[#allocation2 + $0x648] sm:$0xff]
    %v230 = vld [vmem:[#allocation2 + $0x650] sm:$0xff]
    %v231 = vld [vmem:[#allocation2 + $0x658] sm:$0xff]
    %v232 = vld [vmem:[#allocation2 + $0x660] sm:$0xff]
    %v233 = vld [vmem:[#allocation2 + $0x668] sm:$0xff]
    %v234 = vld [vmem:[#allocation2 + $0x670] sm:$0xff]
    %v235 = vld [vmem:[#allocation2 + $0x678] sm:$0xff]
    %v236 = vld [vmem:[#allocation2 + $0x680] sm:$0xff]
    %v237 = vld [vmem:[#allocation2 + $0x688] sm:$0xff]
    %v238 = vld [vmem:[#allocation2 + $0x690] sm:$0xff]
    %v239 = vld [vmem:[#allocation2 + $0x698] sm:$0xff]
    %v240 = vld [vmem:[#allocation2 + $0x6a0] sm:$0xff]
    %v241 = vld [vmem:[#allocation2 + $0x6a8] sm:$0xff]
    %v242 = vld [vmem:[#allocation2 + $0x6b0] sm:$0xff]
    %v243 = vld [vmem:[#allocation2 + $0x6b8] sm:$0xff]
    %v244 = vld [vmem:[#allocation2 + $0x6c0] sm:$0xff]
    %v245 = vld [vmem:[#allocation2 + $0x6c8] sm:$0xff]
    %v246 = vld [vmem:[#allocation2 + $0x6d0] sm:$0xff]
    %v247 = vld [vmem:[#allocation2 + $0x6d8] sm:$0xff]
    %v248 = vld [vmem:[#allocation2 + $0x6e0] sm:$0xff]
    %v249 = vld [vmem:[#allocation2 + $0x6e8] sm:$0xff]
    %v250 = vld [vmem:[#allocation2 + $0x6f0] sm:$0xff]
    %v251 = vld [vmem:[#allocation2 + $0x6f8] sm:$0xff]
    %v252 = vld [vmem:[#allocation2 + $0x700] sm:$0xff]
    %v253 = vld [vmem:[#allocation2 + $0x708] sm:$0xff]
    %v254 = vld [vmem:[#allocation2 + $0x710] sm:$0xff]
    %v255 = vld [vmem:[#allocation2 + $0x718] sm:$0xff]
    %v256 = vld [vmem:[#allocation2 + $0x720] sm:$0xff]
    %v257 = vld [vmem:[#allocation2 + $0x728] sm:$0xff]
    %v258 = vld [vmem:[#allocation2 + $0x730] sm:$0xff]
    %v259 = vld [vmem:[#allocation2 + $0x738] sm:$0xff]
    %v260 = vld [vmem:[#allocation2 + $0x740] sm:$0xff]
    %v261 = vld [vmem:[#allocation2 + $0x748] sm:$0xff]
    %v262 = vld [vmem:[#allocation2 + $0x750] sm:$0xff]
    %v263 = vld [vmem:[#allocation2 + $0x758] sm:$0xff]
    %v264 = vld [vmem:[#allocation2 + $0x760] sm:$0xff]
    %v265 = vld [vmem:[#allocation2 + $0x768] sm:$0xff]
    %v266 = vld [vmem:[#allocation2 + $0x770] sm:$0xff]
    %v267 = vld [vmem:[#allocation2 + $0x778] sm:$0xff]
    %v268 = vld [vmem:[#allocation2 + $0x780] sm:$0xff]
    %v269 = vld [vmem:[#allocation2 + $0x788] sm:$0xff]
    %v270 = vld [vmem:[#allocation2 + $0x790] sm:$0xff]
    %v271 = vld [vmem:[#allocation2 + $0x798] sm:$0xff]
    %v272 = vld [vmem:[#allocation2 + $0x7a0] sm:$0xff]
    %v273 = vld [vmem:[#allocation2 + $0x7a8] sm:$0xff]
    %v274 = vld [vmem:[#allocation2 + $0x7b0] sm:$0xff]
    %v275 = vld [vmem:[#allocation2 + $0x7b8] sm:$0xff]
    %v276 = vld [vmem:[#allocation2 + $0x7c0] sm:$0xff]
    %v277 = vld [vmem:[#allocation2 + $0x7c8] sm:$0xff]
    %v278 = vld [vmem:[#allocation2 + $0x7d0] sm:$0xff]
    %v279 = vld [vmem:[#allocation2 + $0x7d8] sm:$0xff]
    %v280 = vld [vmem:[#allocation2 + $0x7e0] sm:$0xff]
    %v281 = vld [vmem:[#allocation2 + $0x7e8] sm:$0xff]
    %v282 = vld [vmem:[#allocation2 + $0x7f0] sm:$0xff]
    %v283 = vld [vmem:[#allocation2 + $0x7f8] sm:$0xff]
    %284 = vmatprep.subr.mxu0 %v29
    %285 = vmatpush1.msra.mxu0 %v28
    %286 = vmatprep.subr.mxu0 %v37
    %287 = vmatpush1.msra.mxu0 %v36
    %288 = vmatprep.subr.mxu0 %v45
    %289 = vmatpush1.msra.mxu0 %v44
    %290 = vmatprep.subr.mxu0 %v53
    %291 = vmatpush1.msra.mxu0 %v52
    %292 = vmatprep.subr.mxu0 %v61
    %293 = vmatpush1.msra.mxu0 %v60
    %294 = vmatprep.subr.mxu0 %v69
    %295 = vmatpush1.msra.mxu0 %v68
    %296 = vmatprep.subr.mxu0 %v77
    %297 = vmatpush1.msra.mxu0 %v76
    %298 = vmatprep.subr.mxu0 %v85
    %299 = vmatpush1.msra.mxu0 %v84
    %300 = vmatprep.subr.mxu0 %v93
    %301 = vmatpush1.msra.mxu0 %v92
    %302 = vmatprep.subr.mxu0 %v101
    %303 = vmatpush1.msra.mxu0 %v100
    %304 = vmatprep.subr.mxu0 %v109
    %305 = vmatpush1.msra.mxu0 %v108
    %306 = vmatprep.subr.mxu0 %v117
    %307 = vmatpush1.msra.mxu0 %v116
    %308 = vmatprep.subr.mxu0 %v125
    %309 = vmatpush1.msra.mxu0 %v124
    %310 = vmatprep.subr.mxu0 %v133
    %311 = vmatpush1.msra.mxu0 %v132
    %312 = vmatprep.subr.mxu0 %v141
    %313 = vmatpush1.msra.mxu0 %v140
    %314 = vmatprep.subr.mxu0 %v149
    %315 = vmatpush1.msra.mxu0 %v148
    %316 = vmatprep.subr.mxu0 %v157
    %317 = vmatpush1.msra.mxu0 %v156
    %318 = vmatprep.subr.mxu0 %v165
    %319 = vmatpush1.msra.mxu0 %v164
    %320 = vmatprep.subr.mxu0 %v173
    %321 = vmatpush1.msra.mxu0 %v172
    %322 = vmatprep.subr.mxu0 %v181
    %323 = vmatpush1.msra.mxu0 %v180
    %324 = vmatprep.subr.mxu0 %v189
    %325 = vmatpush1.msra.mxu0 %v188
    %326 = vmatprep.subr.mxu0 %v197
    %327 = vmatpush1.msra.mxu0 %v196
    %328 = vmatprep.subr.mxu0 %v205
    %329 = vmatpush1.msra.mxu0 %v204
    %330 = vmatprep.subr.mxu0 %v213
    %331 = vmatpush1.msra.mxu0 %v212
    %332 = vmatprep.subr.mxu0 %v221
    %333 = vmatpush1.msra.mxu0 %v220
    %334 = vmatprep.subr.mxu0 %v229
    %335 = vmatpush1.msra.mxu0 %v228
    %336 = vmatprep.subr.mxu0 %v237
    %337 = vmatpush1.msra.mxu0 %v236
    %338 = vmatprep.subr.mxu0 %v245
    %339 = vmatpush1.msra.mxu0 %v244
    %340 = vmatprep.subr.mxu0 %v253
    %341 = vmatpush1.msra.mxu0 %v252
    %342 = vmatprep.subr.mxu0 %v261
    %343 = vmatpush1.msra.mxu0 %v260
    %344 = vmatprep.subr.mxu0 %v269
    %345 = vmatpush1.msra.mxu0 %v268
    %346 = vmatprep.subr.mxu0 %v277
    %347 = vmatpush1.msra.mxu0 %v276
    %348 = vmatprep.mubr.f32.mxu0 %v27
    %349 = vmatmul.mubr.f32.gmra.mrb[0].mxu0 %v26
    %v350 = vpop.f32.mrb[0].mxu0
    %v351 = vadd.f32 0.0, %v350
    %v352 = vpop.f32.mrb[0].mxu0
    %v353 = vadd.f32 0.0, %v352
    %354 = vdwg.mxu0
    %355 = vmatprep.subr.mxu0 %v31
    %356 = vmatpush1.msra.mxu0 %v30
    %357 = vmatprep.subr.mxu0 %v39
    %358 = vmatpush1.msra.mxu0 %v38
    %359 = vmatprep.subr.mxu0 %v47
    %360 = vmatpush1.msra.mxu0 %v46
    %361 = vmatprep.subr.mxu0 %v55
    %362 = vmatpush1.msra.mxu0 %v54
    %363 = vmatprep.subr.mxu0 %v63
    %364 = vmatpush1.msra.mxu0 %v62
    %365 = vmatprep.subr.mxu0 %v71
    %366 = vmatpush1.msra.mxu0 %v70
    %367 = vmatprep.subr.mxu0 %v79
    %368 = vmatpush1.msra.mxu0 %v78
    %369 = vmatprep.subr.mxu0 %v87
    %370 = vmatpush1.msra.mxu0 %v86
    %371 = vmatprep.subr.mxu0 %v95
    %372 = vmatpush1.msra.mxu0 %v94
    %373 = vmatprep.subr.mxu0 %v103
    %374 = vmatpush1.msra.mxu0 %v102
    %375 = vmatprep.subr.mxu0 %v111
    %376 = vmatpush1.msra.mxu0 %v110
    %377 = vmatprep.subr.mxu0 %v119
    %378 = vmatpush1.msra.mxu0 %v118
    %379 = vmatprep.subr.mxu0 %v127
    %380 = vmatpush1.msra.mxu0 %v126
    %381 = vmatprep.subr.mxu0 %v135
    %382 = vmatpush1.msra.mxu0 %v134
    %383 = vmatprep.subr.mxu0 %v143
    %384 = vmatpush1.msra.mxu0 %v142
    %385 = vmatprep.subr.mxu0 %v151
    %386 = vmatpush1.msra.mxu0 %v150
    %387 = vmatprep.subr.mxu0 %v159
    %388 = vmatpush1.msra.mxu0 %v158
    %389 = vmatprep.subr.mxu0 %v167
    %390 = vmatpush1.msra.mxu0 %v166
    %391 = vmatprep.subr.mxu0 %v175
    %392 = vmatpush1.msra.mxu0 %v174
    %393 = vmatprep.subr.mxu0 %v183
    %394 = vmatpush1.msra.mxu0 %v182
    %395 = vmatprep.subr.mxu0 %v191
    %396 = vmatpush1.msra.mxu0 %v190
    %397 = vmatprep.subr.mxu0 %v199
    %398 = vmatpush1.msra.mxu0 %v198
    %399 = vmatprep.subr.mxu0 %v207
    %400 = vmatpush1.msra.mxu0 %v206
    %401 = vmatprep.subr.mxu0 %v215
    %402 = vmatpush1.msra.mxu0 %v214
    %403 = vmatprep.subr.mxu0 %v223
    %404 = vmatpush1.msra.mxu0 %v222
    %405 = vmatprep.subr.mxu0 %v231
    %406 = vmatpush1.msra.mxu0 %v230
    %407 = vmatprep.subr.mxu0 %v239
    %408 = vmatpush1.msra.mxu0 %v238
    %409 = vmatprep.subr.mxu0 %v247
    %410 = vmatpush1.msra.mxu0 %v246
    %411 = vmatprep.subr.mxu0 %v255
    %412 = vmatpush1.msra.mxu0 %v254
    %413 = vmatprep.subr.mxu0 %v263
    %414 = vmatpush1.msra.mxu0 %v262
    %415 = vmatprep.subr.mxu0 %v271
    %416 = vmatpush1.msra.mxu0 %v270
    %417 = vmatprep.subr.mxu0 %v279
    %418 = vmatpush1.msra.mxu0 %v278
    %419 = vmatprep.mubr.f32.mxu0 %v27
    %420 = vmatmul.mubr.f32.gmra.mrb[0].mxu0 %v26
    %v421 = vpop.f32.mrb[0].mxu0
    %v422 = vadd.f32 0.0, %v421
    %v423 = vpop.f32.mrb[0].mxu0
    %v424 = vadd.f32 0.0, %v423
    %425 = vdwg.mxu0
    %426 = vmatprep.subr.mxu0 %v33
    %427 = vmatpush1.msra.mxu0 %v32
    %428 = vmatprep.subr.mxu0 %v41
    %429 = vmatpush1.msra.mxu0 %v40
    %430 = vmatprep.subr.mxu0 %v49
    %431 = vmatpush1.msra.mxu0 %v48
    %432 = vmatprep.subr.mxu0 %v57
    %433 = vmatpush1.msra.mxu0 %v56
    %434 = vmatprep.subr.mxu0 %v65
    %435 = vmatpush1.msra.mxu0 %v64
    %436 = vmatprep.subr.mxu0 %v73
    %437 = vmatpush1.msra.mxu0 %v72
    %438 = vmatprep.subr.mxu0 %v81
    %439 = vmatpush1.msra.mxu0 %v80
    %440 = vmatprep.subr.mxu0 %v89
    %441 = vmatpush1.msra.mxu0 %v88
    %442 = vmatprep.subr.mxu0 %v97
    %443 = vmatpush1.msra.mxu0 %v96
    %444 = vmatprep.subr.mxu0 %v105
    %445 = vmatpush1.msra.mxu0 %v104
    %446 = vmatprep.subr.mxu0 %v113
    %447 = vmatpush1.msra.mxu0 %v112
    %448 = vmatprep.subr.mxu0 %v121
    %449 = vmatpush1.msra.mxu0 %v120
    %450 = vmatprep.subr.mxu0 %v129
    %451 = vmatpush1.msra.mxu0 %v128
    %452 = vmatprep.subr.mxu0 %v137
    %453 = vmatpush1.msra.mxu0 %v136
    %454 = vmatprep.subr.mxu0 %v145
    %455 = vmatpush1.msra.mxu0 %v144
    %456 = vmatprep.subr.mxu0 %v153
    %457 = vmatpush1.msra.mxu0 %v152
    %458 = vmatprep.subr.mxu0 %v161
    %459 = vmatpush1.msra.mxu0 %v160
    %460 = vmatprep.subr.mxu0 %v169
    %461 = vmatpush1.msra.mxu0 %v168
    %462 = vmatprep.subr.mxu0 %v177
    %463 = vmatpush1.msra.mxu0 %v176
    %464 = vmatprep.subr.mxu0 %v185
    %465 = vmatpush1.msra.mxu0 %v184
    %466 = vmatprep.subr.mxu0 %v193
    %467 = vmatpush1.msra.mxu0 %v192
    %468 = vmatprep.subr.mxu0 %v201
    %469 = vmatpush1.msra.mxu0 %v200
    %470 = vmatprep.subr.mxu0 %v209
    %471 = vmatpush1.msra.mxu0 %v208
    %472 = vmatprep.subr.mxu0 %v217
    %473 = vmatpush1.msra.mxu0 %v216
    %474 = vmatprep.subr.mxu0 %v225
    %475 = vmatpush1.msra.mxu0 %v224
    %476 = vmatprep.subr.mxu0 %v233
    %477 = vmatpush1.msra.mxu0 %v232
    %478 = vmatprep.subr.mxu0 %v241
    %479 = vmatpush1.msra.mxu0 %v240
    %480 = vmatprep.subr.mxu0 %v249
    %481 = vmatpush1.msra.mxu0 %v248
    %482 = vmatprep.subr.mxu0 %v257
    %483 = vmatpush1.msra.mxu0 %v256
    %484 = vmatprep.subr.mxu0 %v265
    %485 = vmatpush1.msra.mxu0 %v264
    %486 = vmatprep.subr.mxu0 %v273
    %487 = vmatpush1.msra.mxu0 %v272
    %488 = vmatprep.subr.mxu0 %v281
    %489 = vmatpush1.msra.mxu0 %v280
    %490 = vmatprep.mubr.f32.mxu0 %v27
    %491 = vmatmul.mubr.f32.gmra.mrb[0].mxu0 %v26
    %v492 = vpop.f32.mrb[0].mxu0
    %v493 = vadd.f32 0.0, %v492
    %v494 = vpop.f32.mrb[0].mxu0
    %v495 = vadd.f32 0.0, %v494
    %496 = vdwg.mxu0
    %497 = vmatprep.subr.mxu0 %v35
    %498 = vmatpush1.msra.mxu0 %v34
    %499 = vmatprep.subr.mxu0 %v43
    %500 = vmatpush1.msra.mxu0 %v42
    %501 = vmatprep.subr.mxu0 %v51
    %502 = vmatpush1.msra.mxu0 %v50
    %503 = vmatprep.subr.mxu0 %v59
    %504 = vmatpush1.msra.mxu0 %v58
    %505 = vmatprep.subr.mxu0 %v67
    %506 = vmatpush1.msra.mxu0 %v66
    %507 = vmatprep.subr.mxu0 %v75
    %508 = vmatpush1.msra.mxu0 %v74
    %509 = vmatprep.subr.mxu0 %v83
    %510 = vmatpush1.msra.mxu0 %v82
    %511 = vmatprep.subr.mxu0 %v91
    %512 = vmatpush1.msra.mxu0 %v90
    %513 = vmatprep.subr.mxu0 %v99
    %514 = vmatpush1.msra.mxu0 %v98
    %515 = vmatprep.subr.mxu0 %v107
    %516 = vmatpush1.msra.mxu0 %v106
    %517 = vmatprep.subr.mxu0 %v115
    %518 = vmatpush1.msra.mxu0 %v114
    %519 = vmatprep.subr.mxu0 %v123
    %520 = vmatpush1.msra.mxu0 %v122
    %521 = vmatprep.subr.mxu0 %v131
    %522 = vmatpush1.msra.mxu0 %v130
    %523 = vmatprep.subr.mxu0 %v139
    %524 = vmatpush1.msra.mxu0 %v138
    %525 = vmatprep.subr.mxu0 %v147
    %526 = vmatpush1.msra.mxu0 %v146
    %527 = vmatprep.subr.mxu0 %v155
    %528 = vmatpush1.msra.mxu0 %v154
    %529 = vmatprep.subr.mxu0 %v163
    %530 = vmatpush1.msra.mxu0 %v162
    %531 = vmatprep.subr.mxu0 %v171
    %532 = vmatpush1.msra.mxu0 %v170
    %533 = vmatprep.subr.mxu0 %v179
    %534 = vmatpush1.msra.mxu0 %v178
    %535 = vmatprep.subr.mxu0 %v187
    %536 = vmatpush1.msra.mxu0 %v186
    %537 = vmatprep.subr.mxu0 %v195
    %538 = vmatpush1.msra.mxu0 %v194
    %539 = vmatprep.subr.mxu0 %v203
    %540 = vmatpush1.msra.mxu0 %v202
    %541 = vmatprep.subr.mxu0 %v211
    %542 = vmatpush1.msra.mxu0 %v210
    %543 = vmatprep.subr.mxu0 %v219
    %544 = vmatpush1.msra.mxu0 %v218
    %545 = vmatprep.subr.mxu0 %v227
    %546 = vmatpush1.msra.mxu0 %v226
    %547 = vmatprep.subr.mxu0 %v235
    %548 = vmatpush1.msra.mxu0 %v234
    %549 = vmatprep.subr.mxu0 %v243
    %550 = vmatpush1.msra.mxu0 %v242
    %551 = vmatprep.subr.mxu0 %v251
    %552 = vmatpush1.msra.mxu0 %v250
    %553 = vmatprep.subr.mxu0 %v259
    %554 = vmatpush1.msra.mxu0 %v258
    %555 = vmatprep.subr.mxu0 %v267
    %556 = vmatpush1.msra.mxu0 %v266
    %557 = vmatprep.subr.mxu0 %v275
    %558 = vmatpush1.msra.mxu0 %v274
    %559 = vmatprep.subr.mxu0 %v283
    %560 = vmatpush1.msra.mxu0 %v282
    %561 = vmatprep.mubr.f32.mxu0 %v27
    %562 = vmatmul.mubr.f32.gmra.mrb[0].mxu0 %v26
    %v563 = vpop.f32.mrb[0].mxu0
    %v564 = vadd.f32 0.0, %v563
    %v565 = vpop.f32.mrb[0].mxu0
    %v566 = vadd.f32 0.0, %v565
    %567 = vdwg.mxu0
    %v568 = vpack.c.bf16 %v351, %v351
    %v569 = vpack.c.bf16 %v353, %v353
    %v570 = vpack.c.bf16 %v422, %v422
    %v571 = vpack.c.bf16 %v424, %v424
    %v572 = vpack.c.bf16 %v493, %v493
    %v573 = vpack.c.bf16 %v495, %v495
    %v574 = vpack.c.bf16 %v564, %v564
    %v575 = vpack.c.bf16 %v566, %v566
    %v584 = vunpack.c.l.b16 %v568
    %v585 = vunpack.c.l.b16 %v569
    %v586 = vunpack.c.l.b16 %v570
    %v587 = vunpack.c.l.b16 %v571
    %v588 = vunpack.c.l.b16 %v572
    %v589 = vunpack.c.l.b16 %v573
    %v590 = vunpack.c.l.b16 %v574
    %v591 = vunpack.c.l.b16 %v575
    %v592 = vpack.c.b16 %v585, %v584
    %v593 = vpack.c.b16 %v587, %v586
    %v594 = vpack.c.b16 %v589, %v588
    %v595 = vpack.c.b16 %v591, %v590
    %600 = vst [vmem:[%s2] sm:$0xff] %v592
    %601 = vst [vmem:[%s2 + $0x8] sm:$0xff] %v593
    %602 = vst [vmem:[%s2 + $0x10] sm:$0xff] %v594
    %603 = vst [vmem:[%s2 + $0x18] sm:$0xff] %v595
    // Predicated region
    $region14: #{bfloat16_upsample_2d.1} parent=1 // pred_check
      _
    $region15: #{bfloat16_upsample_2d.1} parent=1 // pred_check_branch
      %605 = sbr.rel (0) target = $region17
    $region16: #{bfloat16_upsample_2d.1} parent=1 // pred_region
      _
    $region17: #{bfloat16_upsample_2d.1} parent=1 // pred_fallthru
      _
    // Predicated region
    $region18: #{bfloat16_upsample_2d.1} parent=1 // pred_check
      _
    $region19: #{bfloat16_upsample_2d.1} parent=1 // pred_check_branch
      %607 = sbr.rel (0) target = $region21
    $region20: #{bfloat16_upsample_2d.1} parent=1 // pred_region
      _
    $region21: #{bfloat16_upsample_2d.1} parent=1 // pred_fallthru
      _
    %608 = vsyncpa [#allocation3], 1

</llo_original>
